<compile_context>
chip_gen: v5e
topology: v5e:2x2
jax: 0.10.0
libtpu: 0.0.40
codegen_flags: <defaults>
</compile_context>

<pallas_src>
import jax
import jax.numpy as jnp
from jax.experimental import pallas as pl
from jax.experimental.pallas import tpu as pltpu


def _make_kernel(mode, depth):
    """Kernel computing the fused forward on one (batch, pixel-tile) block."""

    def kernel(coords_ref, theta_ref, pe_w_ref, pe_b_ref, *refs):
        # refs = (w0, b0, w1, b1, ..., w{depth-1}, b{depth-1}, o_ref)
        o_ref = refs[-1]
        params = refs[:-1]

        coords = coords_ref[0].astype(jnp.float32)   # (coords_dim, tile_p)
        theta = theta_ref[0].astype(jnp.float32)     # (in_ch, tile_p)

        # position encoder: 1x1 conv == channels-first matmul on the MXU.
        f = (jnp.dot(pe_w_ref[...], coords, preferred_element_type=jnp.float32)
             + pe_b_ref[...])

        # time embedding
        if mode == "ADD":
            f = f + theta
        elif mode == "MULTIPLY":
            f = f * theta
        else:  # CONCAT (along the channel / sublane axis)
            f = jnp.concatenate([f, theta], axis=0)

        # decoder MLP: conv + ReLU for every layer except the last.
        h = f
        for i in range(depth - 1):
            w, b = params[2 * i], params[2 * i + 1]
            h = jnp.dot(w[...], h, preferred_element_type=jnp.float32) + b[...]
            h = jnp.maximum(h, 0.0)
        w, b = params[2 * (depth - 1)], params[2 * (depth - 1) + 1]
        h = jnp.dot(w[...], h, preferred_element_type=jnp.float32) + b[...]

        o_ref[0] = h.astype(o_ref.dtype)

    return kernel


def _pick_pixel_tile(hw, max_tile=8192):
    """Largest pixel tile: the full spatial extent if small, else a 128-multiple divisor."""
    if hw <= max_tile:
        return hw
    t = (max_tile // 128) * 128
    while t >= 128:
        if hw % t == 0:
            return t
        t -= 128
    return hw  # fallback: single block


def conv1x1_decoder_lpe_pallas(coords_nchw, theta_nchw, pe_w, pe_b,
                               layer_ws, layer_bs, *, mode="CONCAT", tile_p=None):
    """Fused forward of Conv1x1DecoderLearnedPositionEmbedding.

    coords_nchw: (N, coords_dim, H, W)
    theta_nchw:  (N, in_ch, H, W)             (the module's self.theta)
    pe_w:        (in_ch, coords_dim)          Conv2d weight, 1x1 spatial dims squeezed
    pe_b:        (in_ch, 1)
    layer_ws[i]: (out_i, in_i); layer_bs[i]: (out_i, 1)
    """
    assert mode in ("ADD", "MULTIPLY", "CONCAT")
    depth = len(layer_ws)
    n, cd, h, w = coords_nchw.shape
    in_ch = theta_nchw.shape[1]
    out_ch = layer_ws[-1].shape[0]
    hw = h * w
    if tile_p is None:
        tile_p = _pick_pixel_tile(hw)
    assert hw % tile_p == 0, "pixel count per image must be divisible by tile_p"

    # NCHW -> (N, C, H*W): contiguous reshape only, no transpose / HBM round trip.
    coords_r = coords_nchw.reshape(n, cd, hw)
    theta_r = theta_nchw.reshape(n, in_ch, hw)

    kernel = _make_kernel(mode, depth)

    def pix_spec(c):
        return pl.BlockSpec((1, c, tile_p), lambda b, p: (b, 0, p))

    def full_spec(arr):
        # Tiny, block-invariant params: pass whole (kept VMEM-resident across steps).
        return pl.BlockSpec(arr.shape, lambda b, p: (0, 0))

    in_specs = [pix_spec(cd), pix_spec(in_ch), full_spec(pe_w), full_spec(pe_b)]
    flat_params = []
    for wi, bi in zip(layer_ws, layer_bs):
        in_specs.append(full_spec(wi))
        in_specs.append(full_spec(bi))
        flat_params.extend([wi, bi])

    # Advisory cost estimate (ReLU only -> no transcendentals).
    m = n * hw
    hidden = layer_ws[0].shape[0]
    in0 = layer_ws[0].shape[1]
    flops = 2 * m * (cd * in_ch + in0 * hidden
                     + max(depth - 2, 0) * hidden * hidden + hidden * out_ch)
    bytes_accessed = 4 * (m * (cd + in_ch + out_ch)
                          + sum(int(a.size) for a in [pe_w, pe_b] + flat_params))

    out_r = pl.pallas_call(
        kernel,
        out_shape=jax.ShapeDtypeStruct((n, out_ch, hw), coords_nchw.dtype),
        grid_spec=pltpu.PrefetchScalarGridSpec(
            num_scalar_prefetch=0,
            grid=(n, hw // tile_p),
            in_specs=in_specs,
            out_specs=pl.BlockSpec((1, out_ch, tile_p), lambda b, p: (b, 0, p)),
        ),
        compiler_params=pltpu.CompilerParams(
            dimension_semantics=("parallel", "parallel")),
        cost_estimate=pl.CostEstimate(
            flops=flops, transcendentals=0, bytes_accessed=bytes_accessed),
    )(coords_r, theta_r, pe_w, pe_b, *flat_params)

    # (N, C_out, H*W) -> NCHW: contiguous reshape only.
    return out_r.reshape(n, out_ch, h, w)


def _reference(coords, theta, pe_w, pe_b, layer_ws, layer_bs, mode):
    """Pure-JAX reference mirroring the PyTorch module exactly (f32, ReLU)."""
    n, cd, hh, ww = coords.shape
    c = coords.reshape(n, cd, hh * ww).astype(jnp.float32)
    t = theta.reshape(n, theta.shape[1], hh * ww).astype(jnp.float32)
    f = jnp.einsum("oi,nip->nop", pe_w, c) + pe_b[None]
    if mode == "ADD":
        f = f + t
    elif mode == "MULTIPLY":
        f = f * t
    else:
        f = jnp.concatenate([f, t], axis=1)
    h = f
    for i in range(len(layer_ws)):
        h = jnp.einsum("oi,nip->nop", layer_ws[i], h) + layer_bs[i][None]
        if i < len(layer_ws) - 1:
            h = jnp.maximum(h, 0.0)
    out_ch = layer_ws[-1].shape[0]
    return h.reshape(n, out_ch, hh, ww).astype(coords.dtype)


if __name__ == "__main__":
    # Module hyperparameters (small, consistent with the forward pass).
    coords_dim = 2
    in_channels = 8
    hidden_channels = 32
    out_channels = 3
    depth = 4                      # conv, ReLU, conv, ReLU, conv, ReLU, conv
    N, H, W = 2, 16, 16

    key = jax.random.PRNGKey(0)
    keys = jax.random.split(key, 4 + 2 * depth)
    k_coords, k_theta, k_pew, k_peb = keys[:4]
    k_layers = keys[4:]

    coords = jax.random.normal(k_coords, (N, coords_dim, H, W), jnp.float32)
    theta = jax.random.normal(k_theta, (N, in_channels, H, W), jnp.float32)

    # position encoder params (Conv2d weight (out,in,1,1) squeezed to (out,in)).
    pe_w = 0.1 * jax.random.normal(k_pew, (in_channels, coords_dim), jnp.float32)
    pe_b = 0.05 * jax.random.normal(k_peb, (in_channels, 1), jnp.float32)

    # NOTE: activation path kept in f32 to match PyTorch semantics exactly; a bf16
    # HBM-facing variant would halve memory traffic at a small numeric cost.
    for mode in ("ADD", "MULTIPLY", "CONCAT"):
        in0 = 2 * in_channels if mode == "CONCAT" else in_channels
        dims = [in0] + [hidden_channels] * (depth - 1) + [out_channels]
        layer_ws, layer_bs = [], []
        for li in range(depth):
            cin, cout = dims[li], dims[li + 1]
            layer_ws.append(0.1 * jax.random.normal(
                k_layers[2 * li], (cout, cin), jnp.float32))
            layer_bs.append(0.05 * jax.random.normal(
                k_layers[2 * li + 1], (cout, 1), jnp.float32))

        out = conv1x1_decoder_lpe_pallas(coords, theta, pe_w, pe_b,
                                         layer_ws, layer_bs, mode=mode)
        out = jax.block_until_ready(out)

        ref = _reference(coords, theta, pe_w, pe_b, layer_ws, layer_bs, mode)
        assert out.shape == (N, out_channels, H, W)
        assert jnp.allclose(out, ref, atol=1e-4, rtol=1e-4), f"mismatch for mode {mode}"

    print("KERNEL_OK")
</pallas_src>

<mosaic_0001>
module attributes {stable_mosaic.version = 11 : i64} {
  func.func @kernel(%arg0: i32, %arg1: i32, %arg2: memref<1x2x256xf32, #tpu.memory_space<vmem>>, %arg3: memref<1x8x256xf32, #tpu.memory_space<vmem>>, %arg4: memref<8x2xf32, #tpu.memory_space<vmem>>, %arg5: memref<8x1xf32, #tpu.memory_space<vmem>>, %arg6: memref<32x8xf32, #tpu.memory_space<vmem>>, %arg7: memref<32x1xf32, #tpu.memory_space<vmem>>, %arg8: memref<32x32xf32, #tpu.memory_space<vmem>>, %arg9: memref<32x1xf32, #tpu.memory_space<vmem>>, %arg10: memref<32x32xf32, #tpu.memory_space<vmem>>, %arg11: memref<32x1xf32, #tpu.memory_space<vmem>>, %arg12: memref<3x32xf32, #tpu.memory_space<vmem>>, %arg13: memref<3x1xf32, #tpu.memory_space<vmem>>, %arg14: memref<1x3x256xf32, #tpu.memory_space<vmem>>) attributes {dimension_semantics = [#tpu.dimension_semantics<parallel>, #tpu.dimension_semantics<parallel>], iteration_bounds = array<i64: 2, 1>, scalar_prefetch = 0 : i64, scratch_operands = 0 : i64, tpu.core_type = #tpu.core_type<tc>, window_params = [{transform_indices = @transform_0, window_bounds = array<i64: 1, 2, 256>}, {transform_indices = @transform_1, window_bounds = array<i64: 1, 8, 256>}, {pipeline_mode = #tpu.pipeline_mode<synchronous>, transform_indices = @transform_2, window_bounds = array<i64: 8, 2>}, {pipeline_mode = #tpu.pipeline_mode<synchronous>, transform_indices = @transform_3, window_bounds = array<i64: 8, 1>}, {pipeline_mode = #tpu.pipeline_mode<synchronous>, transform_indices = @transform_4, window_bounds = array<i64: 32, 8>}, {pipeline_mode = #tpu.pipeline_mode<synchronous>, transform_indices = @transform_5, window_bounds = array<i64: 32, 1>}, {pipeline_mode = #tpu.pipeline_mode<synchronous>, transform_indices = @transform_6, window_bounds = array<i64: 32, 32>}, {pipeline_mode = #tpu.pipeline_mode<synchronous>, transform_indices = @transform_7, window_bounds = array<i64: 32, 1>}, {pipeline_mode = #tpu.pipeline_mode<synchronous>, transform_indices = @transform_8, window_bounds = array<i64: 32, 32>}, {pipeline_mode = #tpu.pipeline_mode<synchronous>, transform_indices = @transform_9, window_bounds = array<i64: 32, 1>}, {pipeline_mode = #tpu.pipeline_mode<synchronous>, transform_indices = @transform_10, window_bounds = array<i64: 3, 32>}, {pipeline_mode = #tpu.pipeline_mode<synchronous>, transform_indices = @transform_11, window_bounds = array<i64: 3, 1>}, {transform_indices = @transform_12, window_bounds = array<i64: 1, 3, 256>}]} {
    %c0 = arith.constant 0 : index
    %c0_0 = arith.constant 0 : index
    %c0_1 = arith.constant 0 : index
    %0 = vector.load %arg2[%c0, %c0_0, %c0_1] : memref<1x2x256xf32, #tpu.memory_space<vmem>>, vector<1x2x256xf32>
    %1 = vector.shape_cast %0 : vector<1x2x256xf32> to vector<2x256xf32>
    %c0_2 = arith.constant 0 : index
    %c0_3 = arith.constant 0 : index
    %c0_4 = arith.constant 0 : index
    %2 = vector.load %arg3[%c0_2, %c0_3, %c0_4] : memref<1x8x256xf32, #tpu.memory_space<vmem>>, vector<1x8x256xf32>
    %3 = vector.shape_cast %2 : vector<1x8x256xf32> to vector<8x256xf32>
    %c0_5 = arith.constant 0 : index
    %c0_6 = arith.constant 0 : index
    %4 = vector.load %arg4[%c0_5, %c0_6] : memref<8x2xf32, #tpu.memory_space<vmem>>, vector<8x2xf32>
    %cst = arith.constant dense<0.000000e+00> : vector<8x256xf32>
    %5 = tpu.matmul %4, %1, %cst {dimension_numbers = #tpu.dot_dimension_numbers<[1], [0], [0], [1], [0, 0, 1, 1], [], []>} : vector<8x2xf32>, vector<2x256xf32>, vector<8x256xf32> -> vector<8x256xf32>
    %c0_7 = arith.constant 0 : index
    %c0_8 = arith.constant 0 : index
    %6 = vector.load %arg5[%c0_7, %c0_8] : memref<8x1xf32, #tpu.memory_space<vmem>>, vector<8x1xf32>
    %7 = vector.broadcast %6 : vector<8x1xf32> to vector<8x256xf32>
    %8 = arith.addf %5, %7 : vector<8x256xf32>
    %9 = arith.addf %8, %3 : vector<8x256xf32>
    %c0_9 = arith.constant 0 : index
    %c0_10 = arith.constant 0 : index
    %10 = vector.load %arg6[%c0_9, %c0_10] : memref<32x8xf32, #tpu.memory_space<vmem>>, vector<32x8xf32>
    %cst_11 = arith.constant dense<0.000000e+00> : vector<32x256xf32>
    %11 = tpu.matmul %10, %9, %cst_11 {dimension_numbers = #tpu.dot_dimension_numbers<[1], [0], [0], [1], [0, 0, 1, 1], [], []>} : vector<32x8xf32>, vector<8x256xf32>, vector<32x256xf32> -> vector<32x256xf32>
    %c0_12 = arith.constant 0 : index
    %c0_13 = arith.constant 0 : index
    %12 = vector.load %arg7[%c0_12, %c0_13] : memref<32x1xf32, #tpu.memory_space<vmem>>, vector<32x1xf32>
    %13 = vector.broadcast %12 : vector<32x1xf32> to vector<32x256xf32>
    %14 = arith.addf %11, %13 : vector<32x256xf32>
    %cst_14 = arith.constant 0.000000e+00 : f32
    %15 = vector.broadcast %cst_14 : f32 to vector<32x256xf32>
    %16 = arith.maximumf %14, %15 : vector<32x256xf32>
    %c0_15 = arith.constant 0 : index
    %c0_16 = arith.constant 0 : index
    %17 = vector.load %arg8[%c0_15, %c0_16] : memref<32x32xf32, #tpu.memory_space<vmem>>, vector<32x32xf32>
    %cst_17 = arith.constant dense<0.000000e+00> : vector<32x256xf32>
    %18 = tpu.matmul %17, %16, %cst_17 {dimension_numbers = #tpu.dot_dimension_numbers<[1], [0], [0], [1], [0, 0, 1, 1], [], []>} : vector<32x32xf32>, vector<32x256xf32>, vector<32x256xf32> -> vector<32x256xf32>
    %c0_18 = arith.constant 0 : index
    %c0_19 = arith.constant 0 : index
    %19 = vector.load %arg9[%c0_18, %c0_19] : memref<32x1xf32, #tpu.memory_space<vmem>>, vector<32x1xf32>
    %20 = vector.broadcast %19 : vector<32x1xf32> to vector<32x256xf32>
    %21 = arith.addf %18, %20 : vector<32x256xf32>
    %cst_20 = arith.constant 0.000000e+00 : f32
    %22 = vector.broadcast %cst_20 : f32 to vector<32x256xf32>
    %23 = arith.maximumf %21, %22 : vector<32x256xf32>
    %c0_21 = arith.constant 0 : index
    %c0_22 = arith.constant 0 : index
    %24 = vector.load %arg10[%c0_21, %c0_22] : memref<32x32xf32, #tpu.memory_space<vmem>>, vector<32x32xf32>
    %cst_23 = arith.constant dense<0.000000e+00> : vector<32x256xf32>
    %25 = tpu.matmul %24, %23, %cst_23 {dimension_numbers = #tpu.dot_dimension_numbers<[1], [0], [0], [1], [0, 0, 1, 1], [], []>} : vector<32x32xf32>, vector<32x256xf32>, vector<32x256xf32> -> vector<32x256xf32>
    %c0_24 = arith.constant 0 : index
    %c0_25 = arith.constant 0 : index
    %26 = vector.load %arg11[%c0_24, %c0_25] : memref<32x1xf32, #tpu.memory_space<vmem>>, vector<32x1xf32>
    %27 = vector.broadcast %26 : vector<32x1xf32> to vector<32x256xf32>
    %28 = arith.addf %25, %27 : vector<32x256xf32>
    %cst_26 = arith.constant 0.000000e+00 : f32
    %29 = vector.broadcast %cst_26 : f32 to vector<32x256xf32>
    %30 = arith.maximumf %28, %29 : vector<32x256xf32>
    %c0_27 = arith.constant 0 : index
    %c0_28 = arith.constant 0 : index
    %31 = vector.load %arg12[%c0_27, %c0_28] : memref<3x32xf32, #tpu.memory_space<vmem>>, vector<3x32xf32>
    %cst_29 = arith.constant dense<0.000000e+00> : vector<3x256xf32>
    %32 = tpu.matmul %31, %30, %cst_29 {dimension_numbers = #tpu.dot_dimension_numbers<[1], [0], [0], [1], [0, 0, 1, 1], [], []>} : vector<3x32xf32>, vector<32x256xf32>, vector<3x256xf32> -> vector<3x256xf32>
    %c0_30 = arith.constant 0 : index
    %c0_31 = arith.constant 0 : index
    %33 = vector.load %arg13[%c0_30, %c0_31] : memref<3x1xf32, #tpu.memory_space<vmem>>, vector<3x1xf32>
    %34 = vector.broadcast %33 : vector<3x1xf32> to vector<3x256xf32>
    %35 = arith.addf %32, %34 : vector<3x256xf32>
    %c0_32 = arith.constant 0 : index
    %c0_33 = arith.constant 0 : index
    %c0_34 = arith.constant 0 : index
    %36 = vector.load %arg14[%c0_32, %c0_33, %c0_34] : memref<1x3x256xf32, #tpu.memory_space<vmem>>, vector<1x3x256xf32>
    %37 = vector.shape_cast %36 : vector<1x3x256xf32> to vector<3x256xf32>
    %38 = vector.shape_cast %35 : vector<3x256xf32> to vector<1x3x256xf32>
    tpu.vector_store %arg14[%c0_32, %c0_33, %c0_34], %38 {strides = array<i32>} : memref<1x3x256xf32, #tpu.memory_space<vmem>>, vector<1x3x256xf32>,
    return
  }
  func.func @transform_0(%arg0: i32, %arg1: i32) -> (i32, i32, i32) {
    %c0_i32 = arith.constant 0 : i32
    %c0_i32_0 = arith.constant 0 : i32
    return %arg0, %c0_i32, %arg1 : i32, i32, i32
  }
  func.func @transform_1(%arg0: i32, %arg1: i32) -> (i32, i32, i32) {
    %c0_i32 = arith.constant 0 : i32
    %c0_i32_0 = arith.constant 0 : i32
    return %arg0, %c0_i32, %arg1 : i32, i32, i32
  }
  func.func @transform_2(%arg0: i32, %arg1: i32) -> (i32, i32) {
    %c0_i32 = arith.constant 0 : i32
    %c0_i32_0 = arith.constant 0 : i32
    %c0_i32_1 = arith.constant 0 : i32
    return %c0_i32, %c0_i32_0 : i32, i32
  }
  func.func @transform_3(%arg0: i32, %arg1: i32) -> (i32, i32) {
    %c0_i32 = arith.constant 0 : i32
    %c0_i32_0 = arith.constant 0 : i32
    %c0_i32_1 = arith.constant 0 : i32
    return %c0_i32, %c0_i32_0 : i32, i32
  }
  func.func @transform_4(%arg0: i32, %arg1: i32) -> (i32, i32) {
    %c0_i32 = arith.constant 0 : i32
    %c0_i32_0 = arith.constant 0 : i32
    %c0_i32_1 = arith.constant 0 : i32
    return %c0_i32, %c0_i32_0 : i32, i32
  }
  func.func @transform_5(%arg0: i32, %arg1: i32) -> (i32, i32) {
    %c0_i32 = arith.constant 0 : i32
    %c0_i32_0 = arith.constant 0 : i32
    %c0_i32_1 = arith.constant 0 : i32
    return %c0_i32, %c0_i32_0 : i32, i32
  }
  func.func @transform_6(%arg0: i32, %arg1: i32) -> (i32, i32) {
    %c0_i32 = arith.constant 0 : i32
    %c0_i32_0 = arith.constant 0 : i32
    %c0_i32_1 = arith.constant 0 : i32
    return %c0_i32, %c0_i32_0 : i32, i32
  }
  func.func @transform_7(%arg0: i32, %arg1: i32) -> (i32, i32) {
    %c0_i32 = arith.constant 0 : i32
    %c0_i32_0 = arith.constant 0 : i32
    %c0_i32_1 = arith.constant 0 : i32
    return %c0_i32, %c0_i32_0 : i32, i32
  }
  func.func @transform_8(%arg0: i32, %arg1: i32) -> (i32, i32) {
    %c0_i32 = arith.constant 0 : i32
    %c0_i32_0 = arith.constant 0 : i32
    %c0_i32_1 = arith.constant 0 : i32
    return %c0_i32, %c0_i32_0 : i32, i32
  }
  func.func @transform_9(%arg0: i32, %arg1: i32) -> (i32, i32) {
    %c0_i32 = arith.constant 0 : i32
    %c0_i32_0 = arith.constant 0 : i32
    %c0_i32_1 = arith.constant 0 : i32
    return %c0_i32, %c0_i32_0 : i32, i32
  }
  func.func @transform_10(%arg0: i32, %arg1: i32) -> (i32, i32) {
    %c0_i32 = arith.constant 0 : i32
    %c0_i32_0 = arith.constant 0 : i32
    %c0_i32_1 = arith.constant 0 : i32
    return %c0_i32, %c0_i32_0 : i32, i32
  }
  func.func @transform_11(%arg0: i32, %arg1: i32) -> (i32, i32) {
    %c0_i32 = arith.constant 0 : i32
    %c0_i32_0 = arith.constant 0 : i32
    %c0_i32_1 = arith.constant 0 : i32
    return %c0_i32, %c0_i32_0 : i32, i32
  }
  func.func @transform_12(%arg0: i32, %arg1: i32) -> (i32, i32, i32) {
    %c0_i32 = arith.constant 0 : i32
    %c0_i32_0 = arith.constant 0 : i32
    return %arg0, %c0_i32, %arg1 : i32, i32, i32
  }
}

</mosaic_0001>

<llo_original>
// kernel: tpu_custom_call.1
$region0: #{tpu_custom_call.1}
  #allocation0 [shape = 'u32[]', space=smem, size = 0x4, offset = 0x4, fixed_abs, tag = 'smem constant byte address 0x4 - core index']
  #allocation1 [shape = 'u32[72,128]{1,0:T(1,128)}', space=vmem, size = 0x9000, scoped, tag = 'internal scratch']
  %s0 = inlined_call_operand.vmem [shape: f32[2,2,256], index: 0, kind: input, shape index: {}]
  %s1 = inlined_call_operand.vmem [shape: f32[2,8,256], index: 1, kind: input, shape index: {}]
  %s2 = inlined_call_operand.vmem [shape: f32[8,2], index: 2, kind: input, shape index: {}]
  %s3 = inlined_call_operand.vmem [shape: f32[8,1], index: 3, kind: input, shape index: {}]
  %s4 = inlined_call_operand.vmem [shape: f32[32,8], index: 4, kind: input, shape index: {}]
  %s5 = inlined_call_operand.vmem [shape: f32[32,1], index: 5, kind: input, shape index: {}]
  %s6 = inlined_call_operand.vmem [shape: f32[32,32], index: 6, kind: input, shape index: {}]
  %s7 = inlined_call_operand.vmem [shape: f32[32,1], index: 7, kind: input, shape index: {}]
  %s8 = inlined_call_operand.vmem [shape: f32[32,32], index: 8, kind: input, shape index: {}]
  %s9 = inlined_call_operand.vmem [shape: f32[32,1], index: 9, kind: input, shape index: {}]
  %s10 = inlined_call_operand.vmem [shape: f32[3,32], index: 10, kind: input, shape index: {}]
  %s11 = inlined_call_operand.vmem [shape: f32[3,1], index: 11, kind: input, shape index: {}]
  %s12 = inlined_call_operand.vmem [shape: f32[2,3,256], index: 12, kind: output, shape index: {}]
  %s13 = sld [smem:[#allocation0]]
  $region81: #{tpu_custom_call.1} parent=0
    _
  %s15 = ssub.s32 1, %s13
  %s16 = scalar_select 0, %s15, %s13
  loop: start=0, step=1, limit=4
  $region2: #{tpu_custom_call.1} parent=0 // loop_pre_header
    _
  $region3: #{tpu_custom_call.1} parent=0 // loop_header
    %s18 = sphi 0, %s22
    %p19 = scmp.ge.s32.totalorder %s18, 4
    %s25 = sphi 0, %s37
    %s26 = sphi 0, %s33
    %s27 = sphi 0, %s25
    %s28 = sphi 0, %s26
    %s29 = sphi 0, %s27
    %s30 = sphi 0, %s28
    %s42 = sphi 0, %s44
    %s45 = sphi 0, %s42
    %s46 = sphi 0, %s45
    %s62 = sphi 0, %s46
    %s70 = sphi 0, %s72
    %s73 = sphi 0, %s70
    %s74 = sphi 0, %s73
    %s90 = sphi 0, %s74
    %s94 = sphi 0, %s94
    %s96 = sphi 0, %s94
    %s97 = sphi 0, %s96
    %s111 = sphi 0, %s97
    %s115 = sphi 0, %s115
    %s117 = sphi 0, %s115
    %s118 = sphi 0, %s117
    %s132 = sphi 0, %s118
    %s136 = sphi 0, %s136
    %s138 = sphi 0, %s136
    %s139 = sphi 0, %s138
    %s153 = sphi 0, %s139
    %s157 = sphi 0, %s157
    %s159 = sphi 0, %s157
    %s160 = sphi 0, %s159
    %s174 = sphi 0, %s160
    %s178 = sphi 0, %s178
    %s180 = sphi 0, %s178
    %s181 = sphi 0, %s180
    %s195 = sphi 0, %s181
    %s199 = sphi 0, %s199
    %s201 = sphi 0, %s199
    %s202 = sphi 0, %s201
    %s216 = sphi 0, %s202
    %s220 = sphi 0, %s220
    %s222 = sphi 0, %s220
    %s223 = sphi 0, %s222
    %s237 = sphi 0, %s223
    %s241 = sphi 0, %s241
    %s243 = sphi 0, %s241
    %s244 = sphi 0, %s243
    %s258 = sphi 0, %s244
    %s262 = sphi 0, %s262
    %s264 = sphi 0, %s262
    %s265 = sphi 0, %s264
    %s279 = sphi 0, %s265
    %s283 = sphi 0, %s283
    %s285 = sphi 0, %s283
    %s286 = sphi 0, %s285
    %s300 = sphi 0, %s286
    %s308 = sphi 0, %s310
    %s311 = sphi 0, %s308
    %s312 = sphi 0, %s311
    %s328 = sphi 0, %s312
  $region4: #{tpu_custom_call.1} parent=0 // loop_header_branch
    %21 = sbr.rel (%p19) target = $region8
  $region5: #{tpu_custom_call.1} parent=0 // loop_body
    %s23 = ssub.s32 %s18, 1
    %s24 = ssub.s32 %s18, 2
    %s31 = sadd.s32 1, %s26
    %p32 = scmp.ge.s32.totalorder %s31, 1
    %s33 = scalar_select %p32, 0, %s31
    %s34 = sadd.s32 1, %s25
    %s35 = scalar_select %p32, %s34, %s25
    %p36 = scmp.ge.s32.totalorder %s35, 2
    %s37 = scalar_select %p36, 0, %s35
    %s38 = ssub.s32 %s25, %s37
    %s39 = ssub.s32 %s26, %s33
    %s40 = sor.u32 %s38, %s39
    %p41 = scmp.eq.s32.totalorder %s40, 0
    %s43 = sadd.s32 %s42, 1
    %s44 = scalar_select %p41, %s42, %s43
    %p47 = pneg %p41
    %p48 = scmp.eq.s32.totalorder %s18, 1
    %p49 = por %p47, %p48
    %p50 = scmp.ne.s32.totalorder %s42, %s45
    %p51 = scmp.eq.s32.totalorder %s18, 0
    %p52 = por %p50, %p51
    %p53 = scmp.ne.s32.totalorder %s42, %s45
    %p54 = scmp.eq.s32.totalorder %s23, 1
    %p55 = por %p53, %p54
    %p56 = scmp.ne.s32.totalorder %s45, %s46
    %p57 = scmp.eq.s32.totalorder %s23, 0
    %p58 = por %p56, %p57
    %p59 = scmp.ne.s32.totalorder %s45, %s46
    %p60 = scmp.eq.s32.totalorder %s24, 1
    %p61 = por %p59, %p60
    %p63 = scmp.ne.s32.totalorder %s46, %s62
    %p64 = scmp.eq.s32.totalorder %s24, 0
    %p65 = por %p63, %p64
    %s66 = ssub.s32 %s25, %s37
    %s67 = ssub.s32 %s26, %s33
    %s68 = sor.u32 %s66, %s67
    %p69 = scmp.eq.s32.totalorder %s68, 0
    %s71 = sadd.s32 %s70, 1
    %s72 = scalar_select %p69, %s70, %s71
    %p75 = pneg %p69
    %p76 = scmp.eq.s32.totalorder %s18, 1
    %p77 = por %p75, %p76
    %p78 = scmp.ne.s32.totalorder %s70, %s73
    %p79 = scmp.eq.s32.totalorder %s18, 0
    %p80 = por %p78, %p79
    %p81 = scmp.ne.s32.totalorder %s70, %s73
    %p82 = scmp.eq.s32.totalorder %s23, 1
    %p83 = por %p81, %p82
    %p84 = scmp.ne.s32.totalorder %s73, %s74
    %p85 = scmp.eq.s32.totalorder %s23, 0
    %p86 = por %p84, %p85
    %p87 = scmp.ne.s32.totalorder %s73, %s74
    %p88 = scmp.eq.s32.totalorder %s24, 1
    %p89 = por %p87, %p88
    %p91 = scmp.ne.s32.totalorder %s74, %s90
    %p92 = scmp.eq.s32.totalorder %s24, 0
    %p93 = por %p91, %p92
    %s95 = sadd.s32 %s94, 1
    %p98 = scmp.eq.s32.totalorder %s18, 1
    %p99 = scmp.ne.s32.totalorder %s94, %s96
    %p100 = scmp.eq.s32.totalorder %s18, 0
    %p101 = por %p99, %p100
    %p102 = scmp.ne.s32.totalorder %s94, %s96
    %p103 = scmp.eq.s32.totalorder %s23, 1
    %p104 = por %p102, %p103
    %p105 = scmp.ne.s32.totalorder %s96, %s97
    %p106 = scmp.eq.s32.totalorder %s23, 0
    %p107 = por %p105, %p106
    %p108 = scmp.ne.s32.totalorder %s96, %s97
    %p109 = scmp.eq.s32.totalorder %s24, 1
    %p110 = por %p108, %p109
    %p112 = scmp.ne.s32.totalorder %s97, %s111
    %p113 = scmp.eq.s32.totalorder %s24, 0
    %p114 = por %p112, %p113
    %s116 = sadd.s32 %s115, 1
    %p119 = scmp.eq.s32.totalorder %s18, 1
    %p120 = scmp.ne.s32.totalorder %s115, %s117
    %p121 = scmp.eq.s32.totalorder %s18, 0
    %p122 = por %p120, %p121
    %p123 = scmp.ne.s32.totalorder %s115, %s117
    %p124 = scmp.eq.s32.totalorder %s23, 1
    %p125 = por %p123, %p124
    %p126 = scmp.ne.s32.totalorder %s117, %s118
    %p127 = scmp.eq.s32.totalorder %s23, 0
    %p128 = por %p126, %p127
    %p129 = scmp.ne.s32.totalorder %s117, %s118
    %p130 = scmp.eq.s32.totalorder %s24, 1
    %p131 = por %p129, %p130
    %p133 = scmp.ne.s32.totalorder %s118, %s132
    %p134 = scmp.eq.s32.totalorder %s24, 0
    %p135 = por %p133, %p134
    %s137 = sadd.s32 %s136, 1
    %p140 = scmp.eq.s32.totalorder %s18, 1
    %p141 = scmp.ne.s32.totalorder %s136, %s138
    %p142 = scmp.eq.s32.totalorder %s18, 0
    %p143 = por %p141, %p142
    %p144 = scmp.ne.s32.totalorder %s136, %s138
    %p145 = scmp.eq.s32.totalorder %s23, 1
    %p146 = por %p144, %p145
    %p147 = scmp.ne.s32.totalorder %s138, %s139
    %p148 = scmp.eq.s32.totalorder %s23, 0
    %p149 = por %p147, %p148
    %p150 = scmp.ne.s32.totalorder %s138, %s139
    %p151 = scmp.eq.s32.totalorder %s24, 1
    %p152 = por %p150, %p151
    %p154 = scmp.ne.s32.totalorder %s139, %s153
    %p155 = scmp.eq.s32.totalorder %s24, 0
    %p156 = por %p154, %p155
    %s158 = sadd.s32 %s157, 1
    %p161 = scmp.eq.s32.totalorder %s18, 1
    %p162 = scmp.ne.s32.totalorder %s157, %s159
    %p163 = scmp.eq.s32.totalorder %s18, 0
    %p164 = por %p162, %p163
    %p165 = scmp.ne.s32.totalorder %s157, %s159
    %p166 = scmp.eq.s32.totalorder %s23, 1
    %p167 = por %p165, %p166
    %p168 = scmp.ne.s32.totalorder %s159, %s160
    %p169 = scmp.eq.s32.totalorder %s23, 0
    %p170 = por %p168, %p169
    %p171 = scmp.ne.s32.totalorder %s159, %s160
    %p172 = scmp.eq.s32.totalorder %s24, 1
    %p173 = por %p171, %p172
    %p175 = scmp.ne.s32.totalorder %s160, %s174
    %p176 = scmp.eq.s32.totalorder %s24, 0
    %p177 = por %p175, %p176
    %s179 = sadd.s32 %s178, 1
    %p182 = scmp.eq.s32.totalorder %s18, 1
    %p183 = scmp.ne.s32.totalorder %s178, %s180
    %p184 = scmp.eq.s32.totalorder %s18, 0
    %p185 = por %p183, %p184
    %p186 = scmp.ne.s32.totalorder %s178, %s180
    %p187 = scmp.eq.s32.totalorder %s23, 1
    %p188 = por %p186, %p187
    %p189 = scmp.ne.s32.totalorder %s180, %s181
    %p190 = scmp.eq.s32.totalorder %s23, 0
    %p191 = por %p189, %p190
    %p192 = scmp.ne.s32.totalorder %s180, %s181
    %p193 = scmp.eq.s32.totalorder %s24, 1
    %p194 = por %p192, %p193
    %p196 = scmp.ne.s32.totalorder %s181, %s195
    %p197 = scmp.eq.s32.totalorder %s24, 0
    %p198 = por %p196, %p197
    %s200 = sadd.s32 %s199, 1
    %p203 = scmp.eq.s32.totalorder %s18, 1
    %p204 = scmp.ne.s32.totalorder %s199, %s201
    %p205 = scmp.eq.s32.totalorder %s18, 0
    %p206 = por %p204, %p205
    %p207 = scmp.ne.s32.totalorder %s199, %s201
    %p208 = scmp.eq.s32.totalorder %s23, 1
    %p209 = por %p207, %p208
    %p210 = scmp.ne.s32.totalorder %s201, %s202
    %p211 = scmp.eq.s32.totalorder %s23, 0
    %p212 = por %p210, %p211
    %p213 = scmp.ne.s32.totalorder %s201, %s202
    %p214 = scmp.eq.s32.totalorder %s24, 1
    %p215 = por %p213, %p214
    %p217 = scmp.ne.s32.totalorder %s202, %s216
    %p218 = scmp.eq.s32.totalorder %s24, 0
    %p219 = por %p217, %p218
    %s221 = sadd.s32 %s220, 1
    %p224 = scmp.eq.s32.totalorder %s18, 1
    %p225 = scmp.ne.s32.totalorder %s220, %s222
    %p226 = scmp.eq.s32.totalorder %s18, 0
    %p227 = por %p225, %p226
    %p228 = scmp.ne.s32.totalorder %s220, %s222
    %p229 = scmp.eq.s32.totalorder %s23, 1
    %p230 = por %p228, %p229
    %p231 = scmp.ne.s32.totalorder %s222, %s223
    %p232 = scmp.eq.s32.totalorder %s23, 0
    %p233 = por %p231, %p232
    %p234 = scmp.ne.s32.totalorder %s222, %s223
    %p235 = scmp.eq.s32.totalorder %s24, 1
    %p236 = por %p234, %p235
    %p238 = scmp.ne.s32.totalorder %s223, %s237
    %p239 = scmp.eq.s32.totalorder %s24, 0
    %p240 = por %p238, %p239
    %s242 = sadd.s32 %s241, 1
    %p245 = scmp.eq.s32.totalorder %s18, 1
    %p246 = scmp.ne.s32.totalorder %s241, %s243
    %p247 = scmp.eq.s32.totalorder %s18, 0
    %p248 = por %p246, %p247
    %p249 = scmp.ne.s32.totalorder %s241, %s243
    %p250 = scmp.eq.s32.totalorder %s23, 1
    %p251 = por %p249, %p250
    %p252 = scmp.ne.s32.totalorder %s243, %s244
    %p253 = scmp.eq.s32.totalorder %s23, 0
    %p254 = por %p252, %p253
    %p255 = scmp.ne.s32.totalorder %s243, %s244
    %p256 = scmp.eq.s32.totalorder %s24, 1
    %p257 = por %p255, %p256
    %p259 = scmp.ne.s32.totalorder %s244, %s258
    %p260 = scmp.eq.s32.totalorder %s24, 0
    %p261 = por %p259, %p260
    %s263 = sadd.s32 %s262, 1
    %p266 = scmp.eq.s32.totalorder %s18, 1
    %p267 = scmp.ne.s32.totalorder %s262, %s264
    %p268 = scmp.eq.s32.totalorder %s18, 0
    %p269 = por %p267, %p268
    %p270 = scmp.ne.s32.totalorder %s262, %s264
    %p271 = scmp.eq.s32.totalorder %s23, 1
    %p272 = por %p270, %p271
    %p273 = scmp.ne.s32.totalorder %s264, %s265
    %p274 = scmp.eq.s32.totalorder %s23, 0
    %p275 = por %p273, %p274
    %p276 = scmp.ne.s32.totalorder %s264, %s265
    %p277 = scmp.eq.s32.totalorder %s24, 1
    %p278 = por %p276, %p277
    %p280 = scmp.ne.s32.totalorder %s265, %s279
    %p281 = scmp.eq.s32.totalorder %s24, 0
    %p282 = por %p280, %p281
    %s284 = sadd.s32 %s283, 1
    %p287 = scmp.eq.s32.totalorder %s18, 1
    %p288 = scmp.ne.s32.totalorder %s283, %s285
    %p289 = scmp.eq.s32.totalorder %s18, 0
    %p290 = por %p288, %p289
    %p291 = scmp.ne.s32.totalorder %s283, %s285
    %p292 = scmp.eq.s32.totalorder %s23, 1
    %p293 = por %p291, %p292
    %p294 = scmp.ne.s32.totalorder %s285, %s286
    %p295 = scmp.eq.s32.totalorder %s23, 0
    %p296 = por %p294, %p295
    %p297 = scmp.ne.s32.totalorder %s285, %s286
    %p298 = scmp.eq.s32.totalorder %s24, 1
    %p299 = por %p297, %p298
    %p301 = scmp.ne.s32.totalorder %s286, %s300
    %p302 = scmp.eq.s32.totalorder %s24, 0
    %p303 = por %p301, %p302
    %s304 = ssub.s32 %s25, %s37
    %s305 = ssub.s32 %s26, %s33
    %s306 = sor.u32 %s304, %s305
    %p307 = scmp.eq.s32.totalorder %s306, 0
    %s309 = sadd.s32 %s308, 1
    %s310 = scalar_select %p307, %s308, %s309
    %p313 = pneg %p307
    %p314 = scmp.eq.s32.totalorder %s18, 1
    %p315 = por %p313, %p314
    %p316 = scmp.ne.s32.totalorder %s308, %s311
    %p317 = scmp.eq.s32.totalorder %s18, 0
    %p318 = por %p316, %p317
    %p319 = scmp.ne.s32.totalorder %s308, %s311
    %p320 = scmp.eq.s32.totalorder %s23, 1
    %p321 = por %p319, %p320
    %p322 = scmp.ne.s32.totalorder %s311, %s312
    %p323 = scmp.eq.s32.totalorder %s23, 0
    %p324 = por %p322, %p323
    %p325 = scmp.ne.s32.totalorder %s311, %s312
    %p326 = scmp.eq.s32.totalorder %s24, 1
    %p327 = por %p325, %p326
    %p329 = scmp.ne.s32.totalorder %s312, %s328
    %p330 = scmp.eq.s32.totalorder %s24, 0
    %p331 = por %p329, %p330
    %p332 = scmp.le.s32.totalorder 1, %s18
    %p333 = scmp.lt.s32.totalorder %s18, 3
    %p334 = pnand %p332, %p333
    %p335 = pneg %p334
    // Predicated region
    $region9: #{tpu_custom_call.1} parent=5 // pred_check
      _
    $region10: #{tpu_custom_call.1} parent=5 // pred_check_branch
      %337 = sbr.rel (%p334) target = $region12
    $region11: #{tpu_custom_call.1} parent=5 // pred_region
      %s338 = ssub.s32 %s18, 1
      // Predicated region
      $region13: #{tpu_custom_call.1} parent=11 // pred_check
        %p339 = pneg %p107
      $region14: #{tpu_custom_call.1} parent=11 // pred_check_branch
        %341 = sbr.rel (%p339) target = $region16
      $region15: #{tpu_custom_call.1} parent=11 // pred_region
        _
      $region16: #{tpu_custom_call.1} parent=11 // pred_fallthru
        _
      // Predicated region
      $region17: #{tpu_custom_call.1} parent=11 // pred_check
        %p342 = pneg %p128
      $region18: #{tpu_custom_call.1} parent=11 // pred_check_branch
        %344 = sbr.rel (%p342) target = $region20
      $region19: #{tpu_custom_call.1} parent=11 // pred_region
        _
      $region20: #{tpu_custom_call.1} parent=11 // pred_fallthru
        _
      // Predicated region
      $region21: #{tpu_custom_call.1} parent=11 // pred_check
        %p345 = pneg %p149
      $region22: #{tpu_custom_call.1} parent=11 // pred_check_branch
        %347 = sbr.rel (%p345) target = $region24
      $region23: #{tpu_custom_call.1} parent=11 // pred_region
        _
      $region24: #{tpu_custom_call.1} parent=11 // pred_fallthru
        _
      // Predicated region
      $region25: #{tpu_custom_call.1} parent=11 // pred_check
        %p348 = pneg %p170
      $region26: #{tpu_custom_call.1} parent=11 // pred_check_branch
        %350 = sbr.rel (%p348) target = $region28
      $region27: #{tpu_custom_call.1} parent=11 // pred_region
        _
      $region28: #{tpu_custom_call.1} parent=11 // pred_fallthru
        _
      // Predicated region
      $region29: #{tpu_custom_call.1} parent=11 // pred_check
        %p351 = pneg %p191
      $region30: #{tpu_custom_call.1} parent=11 // pred_check_branch
        %353 = sbr.rel (%p351) target = $region32
      $region31: #{tpu_custom_call.1} parent=11 // pred_region
        _
      $region32: #{tpu_custom_call.1} parent=11 // pred_fallthru
        _
      // Predicated region
      $region33: #{tpu_custom_call.1} parent=11 // pred_check
        %p354 = pneg %p212
      $region34: #{tpu_custom_call.1} parent=11 // pred_check_branch
        %356 = sbr.rel (%p354) target = $region36
      $region35: #{tpu_custom_call.1} parent=11 // pred_region
        _
      $region36: #{tpu_custom_call.1} parent=11 // pred_fallthru
        _
      // Predicated region
      $region37: #{tpu_custom_call.1} parent=11 // pred_check
        %p357 = pneg %p233
      $region38: #{tpu_custom_call.1} parent=11 // pred_check_branch
        %359 = sbr.rel (%p357) target = $region40
      $region39: #{tpu_custom_call.1} parent=11 // pred_region
        _
      $region40: #{tpu_custom_call.1} parent=11 // pred_fallthru
        _
      // Predicated region
      $region41: #{tpu_custom_call.1} parent=11 // pred_check
        %p360 = pneg %p254
      $region42: #{tpu_custom_call.1} parent=11 // pred_check_branch
        %362 = sbr.rel (%p360) target = $region44
      $region43: #{tpu_custom_call.1} parent=11 // pred_region
        _
      $region44: #{tpu_custom_call.1} parent=11 // pred_fallthru
        _
      // Predicated region
      $region45: #{tpu_custom_call.1} parent=11 // pred_check
        %p363 = pneg %p275
      $region46: #{tpu_custom_call.1} parent=11 // pred_check_branch
        %365 = sbr.rel (%p363) target = $region48
      $region47: #{tpu_custom_call.1} parent=11 // pred_region
        _
      $region48: #{tpu_custom_call.1} parent=11 // pred_fallthru
        _
      // Predicated region
      $region49: #{tpu_custom_call.1} parent=11 // pred_check
        %p366 = pneg %p296
      $region50: #{tpu_custom_call.1} parent=11 // pred_check_branch
        %368 = sbr.rel (%p366) target = $region52
      $region51: #{tpu_custom_call.1} parent=11 // pred_region
        _
      $region52: #{tpu_custom_call.1} parent=11 // pred_fallthru
        _
    $region12: #{tpu_custom_call.1} parent=5 // pred_fallthru
      _
    %p369 = scmp.lt.s32.totalorder %s18, 2
    // Predicated region
    $region53: #{tpu_custom_call.1} parent=5 // pred_check
      %p370 = pneg %p369
    $region54: #{tpu_custom_call.1} parent=5 // pred_check_branch
      %372 = sbr.rel (%p370) target = $region56
    $region55: #{tpu_custom_call.1} parent=5 // pred_region
      // Predicated region
      $region57: #{tpu_custom_call.1} parent=55 // pred_check
        %p373 = pneg %p52
      $region58: #{tpu_custom_call.1} parent=55 // pred_check_branch
        %375 = sbr.rel (%p373) target = $region60
      $region59: #{tpu_custom_call.1} parent=55 // pred_region
        %s376 = smul.u32 2, %s26
        %p377 = scmp.lt.s32.totalorder %s25, 1
        %s378 = scalar_select %p377, %s25, 1
        %p379 = scmp.lt.s32.totalorder %s376, 1
        %s380 = scalar_select %p379, %s376, 1
        %s381 = smul.addr %s378, 2
        %s382 = sadd.s32 %s380, %s381
        %s383 = smul.addr %s382, 2
        %s384 = scalar_lea.vmem %s0, %s383
        %s385 = smul.u32 2, %s26
      $region60: #{tpu_custom_call.1} parent=55 // pred_fallthru
        _
      // Predicated region
      $region61: #{tpu_custom_call.1} parent=55 // pred_check
        %p386 = pneg %p80
      $region62: #{tpu_custom_call.1} parent=55 // pred_check_branch
        %388 = sbr.rel (%p386) target = $region64
      $region63: #{tpu_custom_call.1} parent=55 // pred_region
        %s389 = smul.u32 2, %s26
        %p390 = scmp.lt.s32.totalorder %s25, 1
        %s391 = scalar_select %p390, %s25, 1
        %p392 = scmp.lt.s32.totalorder %s389, 1
        %s393 = scalar_select %p392, %s389, 1
        %s394 = smul.addr %s391, 2
        %s395 = sadd.s32 %s393, %s394
        %s396 = smul.addr %s395, 8
        %s397 = scalar_lea.vmem %s1, %s396
        %s398 = smul.u32 2, %s26
      $region64: #{tpu_custom_call.1} parent=55 // pred_fallthru
        _
    $region56: #{tpu_custom_call.1} parent=5 // pred_fallthru
      _
    %p399 = scmp.le.s32.totalorder 1, %s18
    %p400 = scmp.lt.s32.totalorder %s18, 3
    %p401 = pnand %p399, %p400
    %p402 = pneg %p401
    // Predicated region
    $region65: #{tpu_custom_call.1} parent=5 // pred_check
      _
    $region66: #{tpu_custom_call.1} parent=5 // pred_check_branch
      %404 = sbr.rel (%p401) target = $region68
    $region67: #{tpu_custom_call.1} parent=5 // pred_region
      %s405 = ssub.s32 %s18, 1
      %s406 = smul.u32 2, %s28
      %p407 = scmp.lt.s32.totalorder %s27, 1
      %s408 = scalar_select %p407, %s27, 1
      %p409 = scmp.lt.s32.totalorder %s406, 1
      %s410 = scalar_select %p409, %s406, 1
      %s411 = smul.addr %s408, 2
      %s412 = sadd.s32 %s410, %s411
      %s413 = smul.addr %s412, 2
      %s414 = scalar_lea.vmem %s0, %s413
      %p415 = pneg %p58
      %p416 = pneg %p55
      %s417 = smul.u32 2, %s28
      %p418 = scmp.lt.s32.totalorder %s27, 1
      %s419 = scalar_select %p418, %s27, 1
      %p420 = scmp.lt.s32.totalorder %s417, 1
      %s421 = scalar_select %p420, %s417, 1
      %s422 = smul.addr %s419, 2
      %s423 = sadd.s32 %s421, %s422
      %s424 = smul.addr %s423, 8
      %s425 = scalar_lea.vmem %s1, %s424
      %p426 = pneg %p86
      %p427 = pneg %p83
      %p428 = pneg %p107
      %p429 = pneg %p104
      %p430 = pneg %p128
      %p431 = pneg %p125
      %p432 = pneg %p149
      %p433 = pneg %p146
      %p434 = pneg %p170
      %p435 = pneg %p167
      %p436 = pneg %p191
      %p437 = pneg %p188
      %p438 = pneg %p212
      %p439 = pneg %p209
      %p440 = pneg %p233
      %p441 = pneg %p230
      %p442 = pneg %p254
      %p443 = pneg %p251
      %p444 = pneg %p275
      %p445 = pneg %p272
      %p446 = pneg %p296
      %p447 = pneg %p293
      %p448 = pneg %p324
      %p449 = pneg %p321
      %s450 = smul.u32 2, %s28
      %p451 = scmp.lt.s32.totalorder %s27, 1
      %s452 = scalar_select %p451, %s27, 1
      %p453 = scmp.lt.s32.totalorder %s450, 1
      %s454 = scalar_select %p453, %s450, 1
      %s455 = smul.addr %s452, 2
      %s456 = sadd.s32 %s454, %s455
      %s457 = smul.addr %s456, 4
      %s458 = scalar_lea.vmem %s12, %s457
      %s459 = smul.u32 2, %s28
      %p460 = scmp.lt.s32.totalorder %s27, 1
      %s461 = scalar_select %p460, %s27, 1
      %p462 = scmp.lt.s32.totalorder %s459, 1
      %s463 = scalar_select %p462, %s459, 1
      %s464 = smul.addr %s461, 2
      %s465 = sadd.s32 %s463, %s464
      %s466 = smul.addr %s465, 2
      %s467 = scalar_lea.vmem %s0, %s466
      %s468 = smul.u32 2, %s28
      %s469 = smul.u32 2, %s28
      %p470 = scmp.lt.s32.totalorder %s27, 1
      %s471 = scalar_select %p470, %s27, 1
      %p472 = scmp.lt.s32.totalorder %s469, 1
      %s473 = scalar_select %p472, %s469, 1
      %s474 = smul.addr %s471, 2
      %s475 = sadd.s32 %s473, %s474
      %s476 = smul.addr %s475, 8
      %s477 = scalar_lea.vmem %s1, %s476
      %s478 = smul.u32 2, %s28
      %s479 = smul.u32 2, %s28
      %p480 = scmp.lt.s32.totalorder %s27, 1
      %s481 = scalar_select %p480, %s27, 1
      %p482 = scmp.lt.s32.totalorder %s479, 1
      %s483 = scalar_select %p482, %s479, 1
      %s484 = smul.addr %s481, 2
      %s485 = sadd.s32 %s483, %s484
      %s486 = smul.addr %s485, 4
      %s487 = scalar_lea.vmem %s12, %s486
      %s488 = smul.u32 2, %s28
      %v489 = vld [vmem:[%s467] sm:$0xf]
      %v490 = vld [vmem:[%s477] sm:$0xff]
      %v491 = vld [vmem:[%s477 + $0x8] sm:$0xff]
      %v492 = vld [vmem:[%s2] sm:$0xff]
      %v493 = vld [vmem:[%s3] sm:$0xff]
      %495 = vset.pattern.permute.xlu0 0
      %496 = vperm.xlu0 %495, %v493
      %v497 = vpop.permute.xlu0 %496
      %500 = vst [vmem:[#allocation1] ss:$4 sm:$0xff] %v489
      %v501 = vld.sshfl [vmem:[#allocation1] sm:$0xff pattern:$0x73625140]
      %v502 = vld.sshfl [vmem:[#allocation1 + $0x8] sm:$0xff pattern:$0x73625140]
      %vm503 = vcmask 15360
      %v505 = vsel %vm503, %v492, 0
      %vm507 = vcmask 1041408
      %v508 = vsel %vm507, %v501, 0
      %v510 = vsel %vm507, %v502, 0
      %512 = vmatpush.msra.mxu0 0.0
      %513 = vmatpush.msra.mxu0 0.0
      %514 = vmatpush.msra.mxu0 0.0
      %515 = vmatpush.msra.mxu0 0.0
      %516 = vmatpush.msra.mxu0 0.0
      %517 = vmatpush.msra.mxu0 0.0
      %518 = vmatpush.msra.mxu0 0.0
      %519 = vmatpush.msra.mxu0 0.0
      %520 = vmatpush.msra.mxu0 0.0
      %521 = vmatpush.msra.mxu0 0.0
      %522 = vmatpush.msra.mxu0 0.0
      %523 = vmatpush.msra.mxu0 0.0
      %524 = vmatpush.msra.mxu0 0.0
      %525 = vmatpush.msra.mxu0 0.0
      %526 = vmatpush.msra.mxu0 0.0
      %527 = vmatpush.msra.mxu0 %v508
      %528 = vmatmul.f32.gmra.mxu0 %v505
      %v529 = vpop.f32.mrf.mxu0
      %v530 = vadd.f32 %v497, %v529
      %531 = vdwg.mxu0
      %532 = vmatpush.msra.mxu0 0.0
      %533 = vmatpush.msra.mxu0 0.0
      %534 = vmatpush.msra.mxu0 0.0
      %535 = vmatpush.msra.mxu0 0.0
      %536 = vmatpush.msra.mxu0 0.0
      %537 = vmatpush.msra.mxu0 0.0
      %538 = vmatpush.msra.mxu0 0.0
      %539 = vmatpush.msra.mxu0 0.0
      %540 = vmatpush.msra.mxu0 0.0
      %541 = vmatpush.msra.mxu0 0.0
      %542 = vmatpush.msra.mxu0 0.0
      %543 = vmatpush.msra.mxu0 0.0
      %544 = vmatpush.msra.mxu0 0.0
      %545 = vmatpush.msra.mxu0 0.0
      %546 = vmatpush.msra.mxu0 0.0
      %547 = vmatpush.msra.mxu0 %v510
      %548 = vmatmul.f32.gmra.mxu0 %v505
      %v549 = vpop.f32.mrf.mxu0
      %v550 = vadd.f32 %v497, %v549
      %551 = vdwg.mxu0
      %v552 = vadd.f32 %v530, %v490
      %v553 = vadd.f32 %v550, %v491
      %v554 = vld [vmem:[%s4] sm:$0xff]
      %v555 = vld [vmem:[%s4 + $0x8] sm:$0xff]
      %v556 = vld [vmem:[%s4 + $0x10] sm:$0xff]
      %v557 = vld [vmem:[%s4 + $0x18] sm:$0xff]
      %v558 = vld [vmem:[%s5] sm:$0xff]
      %v559 = vld [vmem:[%s5 + $0x8] sm:$0xff]
      %v560 = vld [vmem:[%s5 + $0x10] sm:$0xff]
      %v561 = vld [vmem:[%s5 + $0x18] sm:$0xff]
      %563 = vset.pattern.permute.xlu0 0
      %564 = vperm.xlu0 %563, %v558
      %v565 = vpop.permute.xlu0 %564
      %568 = vset.pattern.permute.xlu0 0
      %569 = vperm.xlu0 %568, %v559
      %v570 = vpop.permute.xlu0 %569
      %573 = vset.pattern.permute.xlu0 0
      %574 = vperm.xlu0 %573, %v560
      %v575 = vpop.permute.xlu0 %574
      %578 = vset.pattern.permute.xlu0 0
      %579 = vperm.xlu0 %578, %v561
      %v580 = vpop.permute.xlu0 %579
      %vm582 = vcmask 64512
      %v584 = vsel %vm582, %v554, 0
      %v587 = vsel %vm582, %v555, 0
      %v590 = vsel %vm582, %v556, 0
      %v593 = vsel %vm582, %v557, 0
      %595 = vmatpush.msra.mxu0 0.0
      %596 = vmatpush.msra.mxu0 0.0
      %597 = vmatpush.msra.mxu0 0.0
      %598 = vmatpush.msra.mxu0 0.0
      %599 = vmatpush.msra.mxu0 0.0
      %600 = vmatpush.msra.mxu0 0.0
      %601 = vmatpush.msra.mxu0 0.0
      %602 = vmatpush.msra.mxu0 0.0
      %603 = vmatpush.msra.mxu0 0.0
      %604 = vmatpush.msra.mxu0 0.0
      %605 = vmatpush.msra.mxu0 0.0
      %606 = vmatpush.msra.mxu0 0.0
      %607 = vmatpush.msra.mxu0 0.0
      %608 = vmatpush.msra.mxu0 0.0
      %609 = vmatpush.msra.mxu0 0.0
      %610 = vmatpush.msra.mxu0 %v552
      %611 = vmatmul.f32.gmra.mxu0 %v584
      %v612 = vpop.f32.mrf.mxu0
      %v613 = vadd.f32 %v565, %v612
      %614 = vmatmul.f32.gmra.mxu0 %v587
      %v615 = vpop.f32.mrf.mxu0
      %v616 = vadd.f32 %v570, %v615
      %617 = vmatmul.f32.gmra.mxu0 %v590
      %v618 = vpop.f32.mrf.mxu0
      %v619 = vadd.f32 %v575, %v618
      %620 = vmatmul.f32.gmra.mxu0 %v593
      %v621 = vpop.f32.mrf.mxu0
      %v622 = vadd.f32 %v580, %v621
      %623 = vdwg.mxu0
      %624 = vmatpush.msra.mxu0 0.0
      %625 = vmatpush.msra.mxu0 0.0
      %626 = vmatpush.msra.mxu0 0.0
      %627 = vmatpush.msra.mxu0 0.0
      %628 = vmatpush.msra.mxu0 0.0
      %629 = vmatpush.msra.mxu0 0.0
      %630 = vmatpush.msra.mxu0 0.0
      %631 = vmatpush.msra.mxu0 0.0
      %632 = vmatpush.msra.mxu0 0.0
      %633 = vmatpush.msra.mxu0 0.0
      %634 = vmatpush.msra.mxu0 0.0
      %635 = vmatpush.msra.mxu0 0.0
      %636 = vmatpush.msra.mxu0 0.0
      %637 = vmatpush.msra.mxu0 0.0
      %638 = vmatpush.msra.mxu0 0.0
      %639 = vmatpush.msra.mxu0 %v553
      %640 = vmatmul.f32.gmra.mxu0 %v584
      %v641 = vpop.f32.mrf.mxu0
      %v642 = vadd.f32 %v565, %v641
      %643 = vmatmul.f32.gmra.mxu0 %v587
      %v644 = vpop.f32.mrf.mxu0
      %v645 = vadd.f32 %v570, %v644
      %646 = vmatmul.f32.gmra.mxu0 %v590
      %v647 = vpop.f32.mrf.mxu0
      %v648 = vadd.f32 %v575, %v647
      %649 = vmatmul.f32.gmra.mxu0 %v593
      %v650 = vpop.f32.mrf.mxu0
      %v651 = vadd.f32 %v580, %v650
      %652 = vdwg.mxu0
      %v653 = vmax.f32 %v613, 0.0
      %v654 = vmax.f32 %v642, 0.0
      %v655 = vmax.f32 %v616, 0.0
      %v656 = vmax.f32 %v645, 0.0
      %v657 = vmax.f32 %v619, 0.0
      %v658 = vmax.f32 %v648, 0.0
      %v659 = vmax.f32 %v622, 0.0
      %v660 = vmax.f32 %v651, 0.0
      %v661 = vld [vmem:[%s6] sm:$0xff]
      %v662 = vld [vmem:[%s6 + $0x8] sm:$0xff]
      %v663 = vld [vmem:[%s6 + $0x10] sm:$0xff]
      %v664 = vld [vmem:[%s6 + $0x18] sm:$0xff]
      %v665 = vld [vmem:[%s7] sm:$0xff]
      %v666 = vld [vmem:[%s7 + $0x8] sm:$0xff]
      %v667 = vld [vmem:[%s7 + $0x10] sm:$0xff]
      %v668 = vld [vmem:[%s7 + $0x18] sm:$0xff]
      %670 = vset.pattern.permute.xlu0 0
      %671 = vperm.xlu0 %670, %v665
      %v672 = vpop.permute.xlu0 %671
      %675 = vset.pattern.permute.xlu0 0
      %676 = vperm.xlu0 %675, %v666
      %v677 = vpop.permute.xlu0 %676
      %680 = vset.pattern.permute.xlu0 0
      %681 = vperm.xlu0 %680, %v667
      %v682 = vpop.permute.xlu0 %681
      %685 = vset.pattern.permute.xlu0 0
      %686 = vperm.xlu0 %685, %v668
      %v687 = vpop.permute.xlu0 %686
      %vm689 = vcmask 261120
      %v691 = vsel %vm689, %v661, 0
      %v694 = vsel %vm689, %v662, 0
      %v697 = vsel %vm689, %v663, 0
      %v700 = vsel %vm689, %v664, 0
      %702 = vmatpush.msra.mxu0 0.0
      %703 = vmatpush.msra.mxu0 0.0
      %704 = vmatpush.msra.mxu0 0.0
      %705 = vmatpush.msra.mxu0 0.0
      %706 = vmatpush.msra.mxu0 0.0
      %707 = vmatpush.msra.mxu0 0.0
      %708 = vmatpush.msra.mxu0 0.0
      %709 = vmatpush.msra.mxu0 0.0
      %710 = vmatpush.msra.mxu0 0.0
      %711 = vmatpush.msra.mxu0 0.0
      %712 = vmatpush.msra.mxu0 0.0
      %713 = vmatpush.msra.mxu0 0.0
      %714 = vmatpush.msra.mxu0 %v659
      %715 = vmatpush.msra.mxu0 %v657
      %716 = vmatpush.msra.mxu0 %v655
      %717 = vmatpush.msra.mxu0 %v653
      %718 = vmatmul.f32.gmra.mxu0 %v691
      %v719 = vpop.f32.mrf.mxu0
      %v720 = vadd.f32 %v672, %v719
      %721 = vmatmul.f32.gmra.mxu0 %v694
      %v722 = vpop.f32.mrf.mxu0
      %v723 = vadd.f32 %v677, %v722
      %724 = vmatmul.f32.gmra.mxu0 %v697
      %v725 = vpop.f32.mrf.mxu0
      %v726 = vadd.f32 %v682, %v725
      %727 = vmatmul.f32.gmra.mxu0 %v700
      %v728 = vpop.f32.mrf.mxu0
      %v729 = vadd.f32 %v687, %v728
      %730 = vdwg.mxu0
      %731 = vmatpush.msra.mxu0 0.0
      %732 = vmatpush.msra.mxu0 0.0
      %733 = vmatpush.msra.mxu0 0.0
      %734 = vmatpush.msra.mxu0 0.0
      %735 = vmatpush.msra.mxu0 0.0
      %736 = vmatpush.msra.mxu0 0.0
      %737 = vmatpush.msra.mxu0 0.0
      %738 = vmatpush.msra.mxu0 0.0
      %739 = vmatpush.msra.mxu0 0.0
      %740 = vmatpush.msra.mxu0 0.0
      %741 = vmatpush.msra.mxu0 0.0
      %742 = vmatpush.msra.mxu0 0.0
      %743 = vmatpush.msra.mxu0 %v660
      %744 = vmatpush.msra.mxu0 %v658
      %745 = vmatpush.msra.mxu0 %v656
      %746 = vmatpush.msra.mxu0 %v654
      %747 = vmatmul.f32.gmra.mxu0 %v691
      %v748 = vpop.f32.mrf.mxu0
      %v749 = vadd.f32 %v672, %v748
      %750 = vmatmul.f32.gmra.mxu0 %v694
      %v751 = vpop.f32.mrf.mxu0
      %v752 = vadd.f32 %v677, %v751
      %753 = vmatmul.f32.gmra.mxu0 %v697
      %v754 = vpop.f32.mrf.mxu0
      %v755 = vadd.f32 %v682, %v754
      %756 = vmatmul.f32.gmra.mxu0 %v700
      %v757 = vpop.f32.mrf.mxu0
      %v758 = vadd.f32 %v687, %v757
      %759 = vdwg.mxu0
      %v760 = vmax.f32 %v720, 0.0
      %v761 = vmax.f32 %v749, 0.0
      %v762 = vmax.f32 %v723, 0.0
      %v763 = vmax.f32 %v752, 0.0
      %v764 = vmax.f32 %v726, 0.0
      %v765 = vmax.f32 %v755, 0.0
      %v766 = vmax.f32 %v729, 0.0
      %v767 = vmax.f32 %v758, 0.0
      %v768 = vld [vmem:[%s8] sm:$0xff]
      %v769 = vld [vmem:[%s8 + $0x8] sm:$0xff]
      %v770 = vld [vmem:[%s8 + $0x10] sm:$0xff]
      %v771 = vld [vmem:[%s8 + $0x18] sm:$0xff]
      %v772 = vld [vmem:[%s9] sm:$0xff]
      %v773 = vld [vmem:[%s9 + $0x8] sm:$0xff]
      %v774 = vld [vmem:[%s9 + $0x10] sm:$0xff]
      %v775 = vld [vmem:[%s9 + $0x18] sm:$0xff]
      %777 = vset.pattern.permute.xlu0 0
      %778 = vperm.xlu0 %777, %v772
      %v779 = vpop.permute.xlu0 %778
      %782 = vset.pattern.permute.xlu0 0
      %783 = vperm.xlu0 %782, %v773
      %v784 = vpop.permute.xlu0 %783
      %787 = vset.pattern.permute.xlu0 0
      %788 = vperm.xlu0 %787, %v774
      %v789 = vpop.permute.xlu0 %788
      %792 = vset.pattern.permute.xlu0 0
      %793 = vperm.xlu0 %792, %v775
      %v794 = vpop.permute.xlu0 %793
      %v797 = vsel %vm689, %v768, 0
      %v800 = vsel %vm689, %v769, 0
      %v803 = vsel %vm689, %v770, 0
      %v806 = vsel %vm689, %v771, 0
      %808 = vmatpush.msra.mxu0 0.0
      %809 = vmatpush.msra.mxu0 0.0
      %810 = vmatpush.msra.mxu0 0.0
      %811 = vmatpush.msra.mxu0 0.0
      %812 = vmatpush.msra.mxu0 0.0
      %813 = vmatpush.msra.mxu0 0.0
      %814 = vmatpush.msra.mxu0 0.0
      %815 = vmatpush.msra.mxu0 0.0
      %816 = vmatpush.msra.mxu0 0.0
      %817 = vmatpush.msra.mxu0 0.0
      %818 = vmatpush.msra.mxu0 0.0
      %819 = vmatpush.msra.mxu0 0.0
      %820 = vmatpush.msra.mxu0 %v766
      %821 = vmatpush.msra.mxu0 %v764
      %822 = vmatpush.msra.mxu0 %v762
      %823 = vmatpush.msra.mxu0 %v760
      %824 = vmatmul.f32.gmra.mxu0 %v797
      %v825 = vpop.f32.mrf.mxu0
      %v826 = vadd.f32 %v779, %v825
      %827 = vmatmul.f32.gmra.mxu0 %v800
      %v828 = vpop.f32.mrf.mxu0
      %v829 = vadd.f32 %v784, %v828
      %830 = vmatmul.f32.gmra.mxu0 %v803
      %v831 = vpop.f32.mrf.mxu0
      %v832 = vadd.f32 %v789, %v831
      %833 = vmatmul.f32.gmra.mxu0 %v806
      %v834 = vpop.f32.mrf.mxu0
      %v835 = vadd.f32 %v794, %v834
      %836 = vdwg.mxu0
      %837 = vmatpush.msra.mxu0 0.0
      %838 = vmatpush.msra.mxu0 0.0
      %839 = vmatpush.msra.mxu0 0.0
      %840 = vmatpush.msra.mxu0 0.0
      %841 = vmatpush.msra.mxu0 0.0
      %842 = vmatpush.msra.mxu0 0.0
      %843 = vmatpush.msra.mxu0 0.0
      %844 = vmatpush.msra.mxu0 0.0
      %845 = vmatpush.msra.mxu0 0.0
      %846 = vmatpush.msra.mxu0 0.0
      %847 = vmatpush.msra.mxu0 0.0
      %848 = vmatpush.msra.mxu0 0.0
      %849 = vmatpush.msra.mxu0 %v767
      %850 = vmatpush.msra.mxu0 %v765
      %851 = vmatpush.msra.mxu0 %v763
      %852 = vmatpush.msra.mxu0 %v761
      %853 = vmatmul.f32.gmra.mxu0 %v797
      %v854 = vpop.f32.mrf.mxu0
      %v855 = vadd.f32 %v779, %v854
      %856 = vmatmul.f32.gmra.mxu0 %v800
      %v857 = vpop.f32.mrf.mxu0
      %v858 = vadd.f32 %v784, %v857
      %859 = vmatmul.f32.gmra.mxu0 %v803
      %v860 = vpop.f32.mrf.mxu0
      %v861 = vadd.f32 %v789, %v860
      %862 = vmatmul.f32.gmra.mxu0 %v806
      %v863 = vpop.f32.mrf.mxu0
      %v864 = vadd.f32 %v794, %v863
      %865 = vdwg.mxu0
      %v866 = vmax.f32 %v826, 0.0
      %v867 = vmax.f32 %v855, 0.0
      %v868 = vmax.f32 %v829, 0.0
      %v869 = vmax.f32 %v858, 0.0
      %v870 = vmax.f32 %v832, 0.0
      %v871 = vmax.f32 %v861, 0.0
      %v872 = vmax.f32 %v835, 0.0
      %v873 = vmax.f32 %v864, 0.0
      %v874 = vld [vmem:[%s10] sm:$0x7]
      %v875 = vld [vmem:[%s11] sm:$0x7]
      %877 = vset.pattern.permute.xlu0 0
      %878 = vperm.xlu0 %877, %v875
      %v879 = vpop.permute.xlu0 %878
      %v882 = vsel %vm689, %v874, 0
      %884 = vmatpush.msra.mxu0 0.0
      %885 = vmatpush.msra.mxu0 0.0
      %886 = vmatpush.msra.mxu0 0.0
      %887 = vmatpush.msra.mxu0 0.0
      %888 = vmatpush.msra.mxu0 0.0
      %889 = vmatpush.msra.mxu0 0.0
      %890 = vmatpush.msra.mxu0 0.0
      %891 = vmatpush.msra.mxu0 0.0
      %892 = vmatpush.msra.mxu0 0.0
      %893 = vmatpush.msra.mxu0 0.0
      %894 = vmatpush.msra.mxu0 0.0
      %895 = vmatpush.msra.mxu0 0.0
      %896 = vmatpush.msra.mxu0 %v872
      %897 = vmatpush.msra.mxu0 %v870
      %898 = vmatpush.msra.mxu0 %v868
      %899 = vmatpush.msra.mxu0 %v866
      %900 = vmatmul.f32.gmra.mxu0 %v882
      %v901 = vpop.f32.mrf.mxu0
      %v902 = vadd.f32 %v879, %v901
      %903 = vdwg.mxu0
      %904 = vmatpush.msra.mxu0 0.0
      %905 = vmatpush.msra.mxu0 0.0
      %906 = vmatpush.msra.mxu0 0.0
      %907 = vmatpush.msra.mxu0 0.0
      %908 = vmatpush.msra.mxu0 0.0
      %909 = vmatpush.msra.mxu0 0.0
      %910 = vmatpush.msra.mxu0 0.0
      %911 = vmatpush.msra.mxu0 0.0
      %912 = vmatpush.msra.mxu0 0.0
      %913 = vmatpush.msra.mxu0 0.0
      %914 = vmatpush.msra.mxu0 0.0
      %915 = vmatpush.msra.mxu0 0.0
      %916 = vmatpush.msra.mxu0 %v873
      %917 = vmatpush.msra.mxu0 %v871
      %918 = vmatpush.msra.mxu0 %v869
      %919 = vmatpush.msra.mxu0 %v867
      %920 = vmatmul.f32.gmra.mxu0 %v882
      %v921 = vpop.f32.mrf.mxu0
      %v922 = vadd.f32 %v879, %v921
      %923 = vdwg.mxu0
      %v926 = vrot.slane %v922, 4
      %vm927 = vcmask 1043456
      %v928 = vsel %vm927, %v902, %v926
      %930 = vst [vmem:[%s487] sm:$0x77] %v928
      %s931 = smul.u32 2, %s28
      %p932 = scmp.lt.s32.totalorder %s27, 1
      %s933 = scalar_select %p932, %s27, 1
      %p934 = scmp.lt.s32.totalorder %s931, 1
      %s935 = scalar_select %p934, %s931, 1
      %s936 = smul.addr %s933, 2
      %s937 = sadd.s32 %s935, %s936
      %s938 = smul.addr %s937, 4
      %s939 = scalar_lea.vmem %s12, %s938
      // Predicated region
      $region69: #{tpu_custom_call.1} parent=67 // pred_check
        %p940 = pneg %p321
      $region70: #{tpu_custom_call.1} parent=67 // pred_check_branch
        %942 = sbr.rel (%p940) target = $region72
      $region71: #{tpu_custom_call.1} parent=67 // pred_region
        %s943 = smul.u32 2, %s28
      $region72: #{tpu_custom_call.1} parent=67 // pred_fallthru
        _
    $region68: #{tpu_custom_call.1} parent=5 // pred_fallthru
      _
    %p944 = scmp.le.s32.totalorder 2, %s18
    // Predicated region
    $region73: #{tpu_custom_call.1} parent=5 // pred_check
      %p945 = pneg %p944
    $region74: #{tpu_custom_call.1} parent=5 // pred_check_branch
      %947 = sbr.rel (%p945) target = $region76
    $region75: #{tpu_custom_call.1} parent=5 // pred_region
      %s948 = ssub.s32 %s18, 2
      // Predicated region
      $region77: #{tpu_custom_call.1} parent=75 // pred_check
        %p949 = pneg %p327
      $region78: #{tpu_custom_call.1} parent=75 // pred_check_branch
        %951 = sbr.rel (%p949) target = $region80
      $region79: #{tpu_custom_call.1} parent=75 // pred_region
        %s952 = smul.u32 2, %s30
        %p953 = scmp.lt.s32.totalorder %s29, 1
        %s954 = scalar_select %p953, %s29, 1
        %p955 = scmp.lt.s32.totalorder %s952, 1
        %s956 = scalar_select %p955, %s952, 1
        %s957 = smul.addr %s954, 2
        %s958 = sadd.s32 %s956, %s957
        %s959 = smul.addr %s958, 4
        %s960 = scalar_lea.vmem %s12, %s959
      $region80: #{tpu_custom_call.1} parent=75 // pred_fallthru
        _
    $region76: #{tpu_custom_call.1} parent=5 // pred_fallthru
      _
  $region6: #{tpu_custom_call.1} parent=0 // loop_footer
    %s22 = sadd.s32 1, %s18
  $region7: #{tpu_custom_call.1} parent=0 // loop_footer_branch
    %17 = sbr.rel target = $region3
  $region8: #{tpu_custom_call.1} parent=0 // loop_exit
    _

</llo_original>
